<compile_context>
chip_gen: v5e
topology: v5e:2x2
jax: 0.10.0
libtpu: 0.0.40
codegen_flags: <defaults>
</compile_context>

<pallas_src>
import functools

import jax
import jax.numpy as jnp
from jax import lax
from jax.experimental import pallas as pl
from jax.experimental.pallas import tpu as pltpu


def _round_up(v, m):
    return (v + m - 1) // m * m


def _fused_sublayer_kernel(x_ref, gamma_ref, beta_ref, w_ref, b_ref, *rest,
                           eps, dropout_p, feat):
    """One fused pre-norm residual block on a (TM, Fp) row tile.

    x_ref:            (TM, Fp) f32 activations (rows = batch*seq, Fp = F padded to 128)
    gamma/beta/b_ref: (1, Fp)  f32, zero-padded beyond `feat`
    w_ref:            (Fp, Fp) bf16 weights, zero-padded beyond `feat`
    rest:             (bits_ref, o_ref) when dropout_p > 0 else (o_ref,)
    """
    if dropout_p > 0.0:
        bits_ref, o_ref = rest
    else:
        (o_ref,) = rest

    x = x_ref[...].astype(jnp.float32)           # (TM, Fp)
    f_pad = x.shape[-1]

    # ---- LayerNorm (torch parity: UNBIASED variance, eps added to the std) ----
    # Padded feature columns of x are zero, so the row sum is already correct.
    mean = jnp.sum(x, axis=-1, keepdims=True) * (1.0 / feat)
    diff = x - mean
    if feat != f_pad:
        # Zero the padded columns so they do not pollute the variance.
        lane = lax.broadcasted_iota(jnp.int32, diff.shape, 1)
        diff = jnp.where(lane < feat, diff, 0.0)
    var_unbiased = jnp.sum(diff * diff, axis=-1, keepdims=True) * (1.0 / (feat - 1))
    std = jnp.sqrt(var_unbiased)
    # Per-row reciprocal on the (TM, 1) column, then broadcast multiplies over
    # (TM, Fp): TM divisions instead of TM*Fp.  (pl.reciprocal(..., approx=True)
    # would additionally push it to the EUP, but 1/x on the column is already
    # off the hot VPU path and is portable to the interpreter.)
    inv = 1.0 / (std + eps)
    normed = gamma_ref[...] * (diff * inv) + beta_ref[...]

    # ---- sublayer (Linear stand-in) on the MXU: bf16 inputs, f32 accumulate ----
    y = jnp.dot(normed.astype(jnp.bfloat16), w_ref[...],
                preferred_element_type=jnp.float32)
    y = y + b_ref[...]

    # ---- dropout (inverted, training-mode semantics) ----
    # Raw uint32 bits vs an integer threshold: one compare + one select.
    if dropout_p > 0.0:
        keep_prob = 1.0 - dropout_p
        thresh = jnp.uint32(min(int(round(keep_prob * 2.0 ** 32)), 2 ** 32 - 1))
        keep = bits_ref[...] < thresh
        y = jnp.where(keep, y * (1.0 / keep_prob), 0.0)

    # ---- residual ----
    o_ref[...] = (x + y).astype(o_ref.dtype)


def fused_sublayer_connection(x, gamma, beta, w, b, *, dropout_p=0.0,
                              rng_key=None, eps=1e-6):
    """x: (B, S, F) f32.  Returns x + dropout(linear(layernorm(x))), fused."""
    B, S, F = x.shape
    R = B * S

    # Lane-dense feature dim: pad F to a multiple of 128 so output writeback is
    # unmasked full-lane stores (masked partial stores are ~4.5x slower).
    Fp = _round_up(max(F, 128), 128)

    # Row tile: 256 rows (multiple of 128 for the v5e MXU, of 256 for v6e/v7x)
    # when there is enough work; the auto-pipeliner then double-buffers the
    # x/out/bits DMAs across row tiles and the "parallel" axis can shard across
    # both v7x TensorCores.  Tiny inputs (like the demo) fall back to a single
    # 8-aligned tile.
    TM = 256 if R >= 256 else _round_up(R, 8)
    Rp = _round_up(R, TM)

    # VMEM per grid step (auto double-buffered):
    #   2*(TM*Fp*4) x + 2*(TM*Fp*4) out + 2*(TM*Fp*4) bits (dropout only)
    #   + 2*(Fp*Fp*2) W(bf16) + small params
    # e.g. TM=256, Fp=1024 -> ~10 MiB, under the 32 MiB scoped default on every
    # generation (incl. v7x's 64 MiB physical VMEM).  For F >= 2048 on v7x, tile
    # the matmul reduction dim with an extra trailing "arbitrary" K grid axis and
    # an f32 accumulator instead of keeping the whole (Fp, Fp) W block resident.

    if dropout_p > 0.0 and rng_key is None:
        raise ValueError("rng_key is required when dropout_p > 0")

    x2 = jnp.pad(x.reshape(R, F).astype(jnp.float32),
                 ((0, Rp - R), (0, Fp - F)))
    gamma_p = jnp.pad(gamma.astype(jnp.float32), (0, Fp - F)).reshape(1, Fp)
    beta_p = jnp.pad(beta.astype(jnp.float32), (0, Fp - F)).reshape(1, Fp)
    bias_p = jnp.pad(b.astype(jnp.float32), (0, Fp - F)).reshape(1, Fp)
    # bf16 weights: native MXU input dtype (2-4x matmul throughput vs f32) and
    # half the VMEM footprint; accumulation stays f32 inside the kernel.
    w_p = jnp.pad(w.astype(jnp.float32),
                  ((0, Fp - F), (0, Fp - F))).astype(jnp.bfloat16)

    inputs = [x2, gamma_p, beta_p, w_p, bias_p]
    in_specs = [
        pl.BlockSpec((TM, Fp), lambda i: (i, 0)),   # x rows (pipelined)
        pl.BlockSpec((1, Fp), lambda i: (0, 0)),    # gamma (constant block)
        pl.BlockSpec((1, Fp), lambda i: (0, 0)),    # beta
        pl.BlockSpec((Fp, Fp), lambda i: (0, 0)),   # W (constant block)
        pl.BlockSpec((1, Fp), lambda i: (0, 0)),    # bias
    ]
    if dropout_p > 0.0:
        # Dropout mask bits are drawn in the wrapper (pltpu.prng_* has no
        # interpreter lowering) and streamed in like x.  The mask depends only
        # on absolute (row, col), so it is independent of the tiling.
        bits = jax.random.bits(rng_key, (Rp, Fp), dtype=jnp.uint32)
        inputs.append(bits)
        in_specs.append(pl.BlockSpec((TM, Fp), lambda i: (i, 0)))

    kernel = functools.partial(_fused_sublayer_kernel, eps=float(eps),
                               dropout_p=float(dropout_p), feat=F)

    out = pl.pallas_call(
        kernel,
        out_shape=jax.ShapeDtypeStruct((Rp, Fp), x.dtype),
        grid=(Rp // TM,),
        in_specs=in_specs,
        out_specs=pl.BlockSpec((TM, Fp), lambda i: (i, 0)),
        compiler_params=pltpu.CompilerParams(
            # Row tiles are fully independent -> shard across both v7x
            # TensorCores; measured neutral on single-TC v5e/v6e.
            dimension_semantics=("parallel",)),
    )(*inputs)

    return out[:R, :F].reshape(B, S, F)


def encoder_layer(x, params, *, dropout_p=0.0, rng_key=None, eps=1e-6):
    """EncoderLayer.forward: two fused SublayerConnection kernels."""
    k0 = k1 = None
    if dropout_p > 0.0:
        k0, k1 = jax.random.split(rng_key)
    # sublayer[0]: x + dropout(self_attn'(norm_0(x)))
    x = fused_sublayer_connection(x, params["ln0_g"], params["ln0_b"],
                                  params["attn_w"], params["attn_b"],
                                  dropout_p=dropout_p, rng_key=k0, eps=eps)
    # sublayer[1]: x + dropout(feed_forward'(norm_1(x)))
    x = fused_sublayer_connection(x, params["ln1_g"], params["ln1_b"],
                                  params["ff_w"], params["ff_b"],
                                  dropout_p=dropout_p, rng_key=k1, eps=eps)
    return x


# ----------------------------- pure-JAX reference -----------------------------

def _reference_sublayer(x, gamma, beta, w, b, eps=1e-6):
    mean = jnp.mean(x, axis=-1, keepdims=True)
    diff = x - mean
    n = x.shape[-1]
    std = jnp.sqrt(jnp.sum(diff * diff, axis=-1, keepdims=True) / (n - 1))
    normed = gamma * diff / (std + eps) + beta
    # Match the kernel's bf16 matmul inputs (f32 accumulate) for the tolerance.
    y = jnp.einsum("bsf,fg->bsg",
                   normed.astype(jnp.bfloat16).astype(jnp.float32),
                   w.astype(jnp.bfloat16).astype(jnp.float32)) + b
    return x + y


def _reference_encoder_layer(x, params, eps=1e-6):
    x = _reference_sublayer(x, params["ln0_g"], params["ln0_b"],
                            params["attn_w"], params["attn_b"], eps)
    return _reference_sublayer(x, params["ln1_g"], params["ln1_b"],
                               params["ff_w"], params["ff_b"], eps)


if __name__ == "__main__":
    key = jax.random.PRNGKey(0)
    B, S, F = 2, 8, 32    # batch=2, seq=8, hidden(size)=32

    k_x, k_w0, k_b0, k_w1, k_b1, k_drop = jax.random.split(key, 6)
    x = jax.random.normal(k_x, (B, S, F), dtype=jnp.float32)

    params = {
        # LayerNorm params as in __init__: a_2 = ones(size), b_2 = zeros(size)
        "ln0_g": jnp.ones((F,), jnp.float32),
        "ln0_b": jnp.zeros((F,), jnp.float32),
        "ln1_g": jnp.ones((F,), jnp.float32),
        "ln1_b": jnp.zeros((F,), jnp.float32),
        # Deterministic Linear stand-ins for self_attn / feed_forward.
        "attn_w": jax.random.normal(k_w0, (F, F), jnp.float32) * 0.05,
        "attn_b": jax.random.normal(k_b0, (F,), jnp.float32) * 0.05,
        "ff_w": jax.random.normal(k_w1, (F, F), jnp.float32) * 0.05,
        "ff_b": jax.random.normal(k_b1, (F,), jnp.float32) * 0.05,
    }

    # 1) dropout = 0 (eval-equivalent): check against the pure-JAX reference.
    out = jax.block_until_ready(encoder_layer(x, params, dropout_p=0.0))
    ref = _reference_encoder_layer(x, params)
    assert out.shape == (B, S, F)
    assert jnp.allclose(out, ref, atol=1e-2, rtol=1e-2), (
        f"mismatch vs reference: max |diff| = {jnp.max(jnp.abs(out - ref))}")

    # 2) dropout > 0 (training mode): exercises the masked path.
    out_d = jax.block_until_ready(
        encoder_layer(x, params, dropout_p=0.5, rng_key=k_drop))
    assert out_d.shape == (B, S, F)
    assert bool(jnp.all(jnp.isfinite(out_d)))

    print("KERNEL_OK")
</pallas_src>

<mosaic_0001>
module attributes {stable_mosaic.version = 11 : i64} {
  func.func @_fused_sublayer_kernel(%arg0: i32, %arg1: memref<16x128xf32, #tpu.memory_space<vmem>>, %arg2: memref<1x128xf32, #tpu.memory_space<vmem>>, %arg3: memref<1x128xf32, #tpu.memory_space<vmem>>, %arg4: memref<128x128xbf16, #tpu.memory_space<vmem>>, %arg5: memref<1x128xf32, #tpu.memory_space<vmem>>, %arg6: memref<16x128xf32, #tpu.memory_space<vmem>>) attributes {dimension_semantics = [#tpu.dimension_semantics<parallel>], iteration_bounds = array<i64: 1>, scalar_prefetch = 0 : i64, scratch_operands = 0 : i64, tpu.core_type = #tpu.core_type<tc>, window_params = [{transform_indices = @transform_0, window_bounds = array<i64: 16, 128>}, {pipeline_mode = #tpu.pipeline_mode<synchronous>, transform_indices = @transform_1, window_bounds = array<i64: 1, 128>}, {pipeline_mode = #tpu.pipeline_mode<synchronous>, transform_indices = @transform_2, window_bounds = array<i64: 1, 128>}, {pipeline_mode = #tpu.pipeline_mode<synchronous>, transform_indices = @transform_3, window_bounds = array<i64: 128, 128>}, {pipeline_mode = #tpu.pipeline_mode<synchronous>, transform_indices = @transform_4, window_bounds = array<i64: 1, 128>}, {transform_indices = @transform_5, window_bounds = array<i64: 16, 128>}]} {
    %c0 = arith.constant 0 : index
    %c0_0 = arith.constant 0 : index
    %0 = vector.load %arg1[%c0, %c0_0] : memref<16x128xf32, #tpu.memory_space<vmem>>, vector<16x128xf32>
    %cst = arith.constant dense<0.000000e+00> : vector<16xf32>
    %1 = vector.multi_reduction <add>, %0, %cst [1] : vector<16x128xf32> to vector<16xf32>
    %2 = vector.shape_cast %1 : vector<16xf32> to vector<16x1xf32>
    %cst_1 = arith.constant 3.125000e-02 : f32
    %3 = vector.broadcast %cst_1 : f32 to vector<16x1xf32>
    %4 = arith.mulf %2, %3 : vector<16x1xf32>
    %5 = vector.broadcast %4 : vector<16x1xf32> to vector<16x128xf32>
    %6 = arith.subf %0, %5 : vector<16x128xf32>
    %7 = tpu.iota {dimensions = array<i32: 1>} : vector<16x128xi32>
    %c32_i32 = arith.constant 32 : i32
    %8 = vector.broadcast %c32_i32 : i32 to vector<16x128xi32>
    %9 = arith.cmpi slt, %7, %8 : vector<16x128xi32>
    %cst_2 = arith.constant 0.000000e+00 : f32
    %10 = vector.broadcast %cst_2 : f32 to vector<16x128xf32>
    %11 = arith.select %9, %6, %10 : vector<16x128xi1>, vector<16x128xf32>
    %12 = arith.mulf %11, %11 : vector<16x128xf32>
    %cst_3 = arith.constant dense<0.000000e+00> : vector<16xf32>
    %13 = vector.multi_reduction <add>, %12, %cst_3 [1] : vector<16x128xf32> to vector<16xf32>
    %14 = vector.shape_cast %13 : vector<16xf32> to vector<16x1xf32>
    %cst_4 = arith.constant 0.0322580636 : f32
    %15 = vector.broadcast %cst_4 : f32 to vector<16x1xf32>
    %16 = arith.mulf %14, %15 : vector<16x1xf32>
    %17 = math.sqrt %16 : vector<16x1xf32>
    %cst_5 = arith.constant 9.99999997E-7 : f32
    %18 = vector.broadcast %cst_5 : f32 to vector<16x1xf32>
    %19 = arith.addf %17, %18 : vector<16x1xf32>
    %cst_6 = arith.constant 1.000000e+00 : f32
    %20 = vector.broadcast %cst_6 : f32 to vector<16x1xf32>
    %21 = arith.divf %20, %19 : vector<16x1xf32>
    %c0_7 = arith.constant 0 : index
    %c0_8 = arith.constant 0 : index
    %22 = vector.load %arg2[%c0_7, %c0_8] : memref<1x128xf32, #tpu.memory_space<vmem>>, vector<1x128xf32>
    %23 = vector.broadcast %21 : vector<16x1xf32> to vector<16x128xf32>
    %24 = arith.mulf %11, %23 : vector<16x128xf32>
    %25 = vector.broadcast %22 : vector<1x128xf32> to vector<16x128xf32>
    %26 = arith.mulf %25, %24 : vector<16x128xf32>
    %c0_9 = arith.constant 0 : index
    %c0_10 = arith.constant 0 : index
    %27 = vector.load %arg3[%c0_9, %c0_10] : memref<1x128xf32, #tpu.memory_space<vmem>>, vector<1x128xf32>
    %28 = vector.broadcast %27 : vector<1x128xf32> to vector<16x128xf32>
    %29 = arith.addf %26, %28 : vector<16x128xf32>
    %30 = arith.truncf %29 : vector<16x128xf32> to vector<16x128xbf16>
    %c0_11 = arith.constant 0 : index
    %c0_12 = arith.constant 0 : index
    %31 = vector.load %arg4[%c0_11, %c0_12] : memref<128x128xbf16, #tpu.memory_space<vmem>>, vector<128x128xbf16>
    %cst_13 = arith.constant dense<0.000000e+00> : vector<16x128xf32>
    %32 = tpu.matmul %30, %31, %cst_13 {dimension_numbers = #tpu.dot_dimension_numbers<[1], [0], [0], [1], [0, 0, 1, 1], [], []>} : vector<16x128xbf16>, vector<128x128xbf16>, vector<16x128xf32> -> vector<16x128xf32>
    %c0_14 = arith.constant 0 : index
    %c0_15 = arith.constant 0 : index
    %33 = vector.load %arg5[%c0_14, %c0_15] : memref<1x128xf32, #tpu.memory_space<vmem>>, vector<1x128xf32>
    %34 = vector.broadcast %33 : vector<1x128xf32> to vector<16x128xf32>
    %35 = arith.addf %32, %34 : vector<16x128xf32>
    %36 = arith.addf %0, %35 : vector<16x128xf32>
    %c0_16 = arith.constant 0 : index
    %c0_17 = arith.constant 0 : index
    %37 = vector.load %arg6[%c0_16, %c0_17] : memref<16x128xf32, #tpu.memory_space<vmem>>, vector<16x128xf32>
    tpu.vector_store %arg6[%c0_16, %c0_17], %36 {strides = array<i32>} : memref<16x128xf32, #tpu.memory_space<vmem>>, vector<16x128xf32>,
    return
  }
  func.func @transform_0(%arg0: i32) -> (i32, i32) {
    %c0_i32 = arith.constant 0 : i32
    %c0_i32_0 = arith.constant 0 : i32
    return %arg0, %c0_i32 : i32, i32
  }
  func.func @transform_1(%arg0: i32) -> (i32, i32) {
    %c0_i32 = arith.constant 0 : i32
    %c0_i32_0 = arith.constant 0 : i32
    %c0_i32_1 = arith.constant 0 : i32
    return %c0_i32, %c0_i32_0 : i32, i32
  }
  func.func @transform_2(%arg0: i32) -> (i32, i32) {
    %c0_i32 = arith.constant 0 : i32
    %c0_i32_0 = arith.constant 0 : i32
    %c0_i32_1 = arith.constant 0 : i32
    return %c0_i32, %c0_i32_0 : i32, i32
  }
  func.func @transform_3(%arg0: i32) -> (i32, i32) {
    %c0_i32 = arith.constant 0 : i32
    %c0_i32_0 = arith.constant 0 : i32
    %c0_i32_1 = arith.constant 0 : i32
    return %c0_i32, %c0_i32_0 : i32, i32
  }
  func.func @transform_4(%arg0: i32) -> (i32, i32) {
    %c0_i32 = arith.constant 0 : i32
    %c0_i32_0 = arith.constant 0 : i32
    %c0_i32_1 = arith.constant 0 : i32
    return %c0_i32, %c0_i32_0 : i32, i32
  }
  func.func @transform_5(%arg0: i32) -> (i32, i32) {
    %c0_i32 = arith.constant 0 : i32
    %c0_i32_0 = arith.constant 0 : i32
    return %arg0, %c0_i32 : i32, i32
  }
}

</mosaic_0001>

<llo_original>
// kernel: tpu_custom_call.1
$region0: #{tpu_custom_call.1}
  #allocation0 [shape = 'u32[]', space=smem, size = 0x4, offset = 0x4, fixed_abs, tag = 'smem constant byte address 0x4 - core index']
  #allocation1 [shape = 'u32[72,128]{1,0:T(1,128)}', space=vmem, size = 0x9000, scoped, tag = 'internal scratch']
  %s0 = inlined_call_operand.hbm [shape: f32[16,128], index: 0, kind: input, shape index: {}]
  %s1 = inlined_call_operand.hbm [shape: f32[1,128], index: 1, kind: input, shape index: {}]
  %s2 = inlined_call_operand.vmem [shape: f32[1,128], index: 2, kind: input, shape index: {}]
  %s3 = inlined_call_operand.hbm [shape: bf16[128,128], index: 3, kind: input, shape index: {}]
  %s4 = inlined_call_operand.vmem [shape: f32[1,128], index: 4, kind: input, shape index: {}]
  %s5 = inlined_call_operand.hbm [shape: f32[16,128], index: 5, kind: output, shape index: {}]
  %s6 = sld [smem:[#allocation0]]
  $region42: #{tpu_custom_call.1} parent=0
    _
  %s8 = ssub.s32 1, %s6
  %s9 = scalar_select 0, %s8, %s6
  $region1: #{tpu_custom_call.1} parent=0
    #allocation2 [shape = 'u8[8192]{0}', space=vmem, size = 0x2000, scoped, tag = 'input window, operand 0, single buffered']
    #allocation3 [shape = 's32[1]{0}', space=sflag, size = 0x4, scoped, tag = 'scoped memory for tpu_custom_call.1']
    #allocation4 [shape = 's32[1]{0}', space=sflag, size = 0x4, scoped, tag = 'scoped memory for tpu_custom_call.1']
    #allocation5 [shape = 'u8[512]{0}', space=vmem, size = 0x400, scoped, tag = 'input window, operand 1, single buffered']
    #allocation6 [shape = 's32[1]{0}', space=sflag, size = 0x4, scoped, tag = 'scoped memory for tpu_custom_call.1']
    #allocation7 [shape = 'u8[32768]{0}', space=vmem, size = 0x8000, scoped, tag = 'input window, operand 3, single buffered']
    #allocation8 [shape = 'u8[8192]{0}', space=vmem, size = 0x2000, scoped, tag = 'output window, operand 0, single buffered']
    %10 = vsyncpa [#allocation3], 0
    %11 = vsyncpa [#allocation6], 0
    %12 = vsyncpa [#allocation4], 0
    // Predicated region
    $region2: #{tpu_custom_call.1} parent=1 // pred_check
      _
    $region3: #{tpu_custom_call.1} parent=1 // pred_check_branch
      %14 = sbr.rel (0) target = $region5
    $region4: #{tpu_custom_call.1} parent=1 // pred_region
      %16 = vsyncadd [#allocation3], 0
      %s17 = sshll.u32 %s0, 4
      %s18 = int_to_ptr.hbm [resolvable:$true] %s17
      %s19 = sshll.u32 [#allocation2], 4
      %s20 = int_to_ptr.vmem [resolvable:$true] %s19
      %25 = dma.hbm_to_vmem [thread:$0]  %s18, 256, %s20, [#allocation3], 128, 128, 8
    $region5: #{tpu_custom_call.1} parent=1 // pred_fallthru
      _
    // Predicated region
    $region6: #{tpu_custom_call.1} parent=1 // pred_check
      _
    $region7: #{tpu_custom_call.1} parent=1 // pred_check_branch
      %27 = sbr.rel (0) target = $region9
    $region8: #{tpu_custom_call.1} parent=1 // pred_region
      %29 = vsyncadd [#allocation6], 0
      %s31 = sshll.u32 %s1, 4
      %s32 = int_to_ptr.hbm [resolvable:$true] %s31
      %s33 = sshll.u32 [#allocation5], 4
      %s34 = int_to_ptr.vmem [resolvable:$true] %s33
      %36 = dma.hbm_to_vmem [thread:$0]  %s32, 16, %s34, [#allocation6]
    $region9: #{tpu_custom_call.1} parent=1 // pred_fallthru
      _
    // Predicated region
    $region10: #{tpu_custom_call.1} parent=1 // pred_check
      _
    $region11: #{tpu_custom_call.1} parent=1 // pred_check_branch
      %38 = sbr.rel (0) target = $region13
    $region12: #{tpu_custom_call.1} parent=1 // pred_region
      _
    $region13: #{tpu_custom_call.1} parent=1 // pred_fallthru
      _
    // Predicated region
    $region14: #{tpu_custom_call.1} parent=1 // pred_check
      _
    $region15: #{tpu_custom_call.1} parent=1 // pred_check_branch
      %40 = sbr.rel (0) target = $region17
    $region16: #{tpu_custom_call.1} parent=1 // pred_region
      %42 = vsyncadd [#allocation6], 0
      %s43 = sshll.u32 %s3, 4
      %s44 = int_to_ptr.hbm [resolvable:$true] %s43
      %s45 = sshll.u32 [#allocation7], 4
      %s46 = int_to_ptr.vmem [resolvable:$true] %s45
      %51 = dma.hbm_to_vmem [thread:$0]  %s44, 1024, %s46, [#allocation6], 64, 64, 4
    $region17: #{tpu_custom_call.1} parent=1 // pred_fallthru
      _
    // Predicated region
    $region18: #{tpu_custom_call.1} parent=1 // pred_check
      _
    $region19: #{tpu_custom_call.1} parent=1 // pred_check_branch
      %53 = sbr.rel (0) target = $region21
    $region20: #{tpu_custom_call.1} parent=1 // pred_region
      _
    $region21: #{tpu_custom_call.1} parent=1 // pred_fallthru
      _
    // Predicated region
    $region22: #{tpu_custom_call.1} parent=1 // pred_check
      _
    $region23: #{tpu_custom_call.1} parent=1 // pred_check_branch
      %55 = sbr.rel (0) target = $region25
    $region24: #{tpu_custom_call.1} parent=1 // pred_region
      %57 = dma.done [#allocation3], 256
    $region25: #{tpu_custom_call.1} parent=1 // pred_fallthru
      _
    // Predicated region
    $region26: #{tpu_custom_call.1} parent=1 // pred_check
      _
    $region27: #{tpu_custom_call.1} parent=1 // pred_check_branch
      %59 = sbr.rel (0) target = $region29
    $region28: #{tpu_custom_call.1} parent=1 // pred_region
      %61 = dma.done [#allocation6], 16
    $region29: #{tpu_custom_call.1} parent=1 // pred_fallthru
      _
    // Predicated region
    $region30: #{tpu_custom_call.1} parent=1 // pred_check
      _
    $region31: #{tpu_custom_call.1} parent=1 // pred_check_branch
      %63 = sbr.rel (0) target = $region33
    $region32: #{tpu_custom_call.1} parent=1 // pred_region
      %65 = dma.done [#allocation6], 1024
    $region33: #{tpu_custom_call.1} parent=1 // pred_fallthru
      _
    %v66 = vld [vmem:[#allocation2] sm:$0xff]
    %v67 = vld [vmem:[#allocation2 + $0x8] sm:$0xff]
    %68 = vadd.xlane.f32.xlu0 %v66
    %v69 = vpop.xlane.xlu0 %68
    %70 = vadd.xlane.f32.xlu0 %v67
    %v71 = vpop.xlane.xlu0 %70
    %v72 = vmul.f32 %v69, 0.03125
    %v73 = vmul.f32 %v71, 0.03125
    %v74 = vsub.f32 %v66, %v72
    %v75 = vsub.f32 %v67, %v73
    %v76 = vlaneseq
    %v77 = vand.u32 %v76, 127
    %vm78 = vcmp.lt.s32.totalorder %v77, 32
    %v79 = vsel %vm78, %v74, 0.0
    %v80 = vsel %vm78, %v75, 0.0
    %v81 = vmul.f32 %v79, %v79
    %v82 = vmul.f32 %v80, %v80
    %83 = vadd.xlane.f32.xlu0 %v81
    %v84 = vpop.xlane.xlu0 %83
    %85 = vadd.xlane.f32.xlu0 %v82
    %v86 = vpop.xlane.xlu0 %85
    %v87 = vmul.f32 %v84, 0.032258064
    %v88 = vmul.f32 %v86, 0.032258064
    %v89 = vrsqrt.pop %v87
    %v90 = vmul.f32 %v89, %v87
    %v91 = vmul.f32 %v90, %v89
    %v92 = vmul.f32 0.5, %v91
    %v93 = vsub.f32 1.5, %v92
    %v94 = vmul.f32 %v89, %v93
    %v95 = vmul.f32 %v87, %v94
    %vm96 = vcmp.eq.f32.partialorder %v87, inf
    %v97 = vsel %vm96, %v87, %v95
    %vm98 = vcmp.eq.f32.partialorder %v87, 0.0
    %v99 = vand.u32 %v87, 2147483648
    %v100 = vsel %vm98, %v99, %v97
    %v101 = vrsqrt.pop %v88
    %v102 = vmul.f32 %v101, %v88
    %v103 = vmul.f32 %v102, %v101
    %v104 = vmul.f32 0.5, %v103
    %v105 = vsub.f32 1.5, %v104
    %v106 = vmul.f32 %v101, %v105
    %v107 = vmul.f32 %v88, %v106
    %vm108 = vcmp.eq.f32.partialorder %v88, inf
    %v109 = vsel %vm108, %v88, %v107
    %vm110 = vcmp.eq.f32.partialorder %v88, 0.0
    %v111 = vand.u32 %v88, 2147483648
    %v112 = vsel %vm110, %v111, %v109
    %v113 = vadd.f32 %v100, 1e-06
    %v114 = vadd.f32 %v112, 1e-06
    %v115 = vrcp.pop %v113
    %v116 = vmul.f32 %v113, %v115
    %v117 = vsub.f32 1.0, %v116
    %v118 = vmul.f32 %v115, %v117
    %v119 = vadd.f32 %v115, %v118
    %vm120 = vweird.f32 %v113
    %vm121 = vweird.f32 %v115
    %vm122 = vmor %vm120, %vm121
    %v123 = vsel %vm122, %v115, %v119
    %v124 = vand.u32 2147483647, %v113
    %vm125 = vcmp.eq.f32.partialorder %v124, 8.507059e+37
    %v126 = vand.u32 %v113, 2147483648
    %v127 = vor.u32 1.1754944e-38, %v126
    %v128 = vsel %vm125, %v127, %v123
    %v129 = vmul.f32 1.0, %v128
    %v130 = vrcp.pop %v114
    %v131 = vmul.f32 %v114, %v130
    %v132 = vsub.f32 1.0, %v131
    %v133 = vmul.f32 %v130, %v132
    %v134 = vadd.f32 %v130, %v133
    %vm135 = vweird.f32 %v114
    %vm136 = vweird.f32 %v130
    %vm137 = vmor %vm135, %vm136
    %v138 = vsel %vm137, %v130, %v134
    %v139 = vand.u32 2147483647, %v114
    %vm140 = vcmp.eq.f32.partialorder %v139, 8.507059e+37
    %v141 = vand.u32 %v114, 2147483648
    %v142 = vor.u32 1.1754944e-38, %v141
    %v143 = vsel %vm140, %v142, %v138
    %v144 = vmul.f32 1.0, %v143
    %v145 = vld [vmem:[#allocation5] sm:$0x1]
    %v146 = vmul.f32 %v79, %v129
    %v147 = vmul.f32 %v80, %v144
    %v149 = vperm.slane %v145, 0
    %v151 = vmul.f32 %v149, %v146
    %v152 = vmul.f32 %v149, %v147
    %v153 = vld [vmem:[%s2] sm:$0x1]
    %v155 = vperm.slane %v153, 0
    %v157 = vadd.f32 %v151, %v155
    %v158 = vadd.f32 %v152, %v155
    %v159 = vpack.c.bf16 %v158, %v157
    %v160 = vld [vmem:[#allocation7] sm:$0xf]
    %v161 = vld [vmem:[#allocation7 + $0x4] sm:$0xf]
    %v162 = vld [vmem:[#allocation7 + $0x8] sm:$0xf]
    %v163 = vld [vmem:[#allocation7 + $0xc] sm:$0xf]
    %v164 = vld [vmem:[#allocation7 + $0x10] sm:$0xf]
    %v165 = vld [vmem:[#allocation7 + $0x14] sm:$0xf]
    %v166 = vld [vmem:[#allocation7 + $0x18] sm:$0xf]
    %v167 = vld [vmem:[#allocation7 + $0x1c] sm:$0xf]
    %v168 = vld [vmem:[#allocation7 + $0x20] sm:$0xf]
    %v169 = vld [vmem:[#allocation7 + $0x24] sm:$0xf]
    %v170 = vld [vmem:[#allocation7 + $0x28] sm:$0xf]
    %v171 = vld [vmem:[#allocation7 + $0x2c] sm:$0xf]
    %v172 = vld [vmem:[#allocation7 + $0x30] sm:$0xf]
    %v173 = vld [vmem:[#allocation7 + $0x34] sm:$0xf]
    %v174 = vld [vmem:[#allocation7 + $0x38] sm:$0xf]
    %v175 = vld [vmem:[#allocation7 + $0x3c] sm:$0xf]
    %v176 = vld [vmem:[%s4] sm:$0x1]
    %v178 = vperm.slane %v176, 0
    %v196 = vunpack.c.l.b16 %v160
    %v197 = vunpack.c.l.b16 %v161
    %v198 = vunpack.c.l.b16 %v162
    %v199 = vunpack.c.l.b16 %v163
    %v200 = vunpack.c.l.b16 %v164
    %v201 = vunpack.c.l.b16 %v165
    %v202 = vunpack.c.l.b16 %v166
    %v203 = vunpack.c.l.b16 %v167
    %v204 = vunpack.c.l.b16 %v168
    %v205 = vunpack.c.l.b16 %v169
    %v206 = vunpack.c.l.b16 %v170
    %v207 = vunpack.c.l.b16 %v171
    %v208 = vunpack.c.l.b16 %v172
    %v209 = vunpack.c.l.b16 %v173
    %v210 = vunpack.c.l.b16 %v174
    %v211 = vunpack.c.l.b16 %v175
    %v212 = vpack.c.b16 %v197, %v196
    %v213 = vpack.c.b16 %v199, %v198
    %v214 = vpack.c.b16 %v201, %v200
    %v215 = vpack.c.b16 %v203, %v202
    %v216 = vpack.c.b16 %v205, %v204
    %v217 = vpack.c.b16 %v207, %v206
    %v218 = vpack.c.b16 %v209, %v208
    %v219 = vpack.c.b16 %v211, %v210
    %228 = vmatpush.bf16.msra.mxu0 %v219
    %229 = vmatpush.bf16.msra.mxu0 %v218
    %230 = vmatpush.bf16.msra.mxu0 %v217
    %231 = vmatpush.bf16.msra.mxu0 %v216
    %232 = vmatpush.bf16.msra.mxu0 %v215
    %233 = vmatpush.bf16.msra.mxu0 %v214
    %234 = vmatpush.bf16.msra.mxu0 %v213
    %235 = vmatpush.bf16.msra.mxu0 %v212
    %236 = vmatmul.bf16.gmra.mxu0 %v159
    %v237 = vpop.f32.mrf.mxu0
    %v238 = vadd.f32 %v178, %v237
    %v239 = vpop.f32.mrf.mxu0
    %v240 = vadd.f32 %v178, %v239
    %241 = vdwg.mxu0
    %v242 = vadd.f32 %v66, %v238
    %v243 = vadd.f32 %v67, %v240
    %244 = vst [vmem:[#allocation8] sm:$0xff] %v242
    %245 = vst [vmem:[#allocation8 + $0x8] sm:$0xff] %v243
    // Predicated region
    $region34: #{tpu_custom_call.1} parent=1 // pred_check
      _
    $region35: #{tpu_custom_call.1} parent=1 // pred_check_branch
      %247 = sbr.rel (0) target = $region37
    $region36: #{tpu_custom_call.1} parent=1 // pred_region
      %249 = vsyncadd [#allocation4], 0
      %s250 = sshll.u32 [#allocation8], 4
      %s251 = int_to_ptr.vmem [resolvable:$true] %s250
      %s252 = sshll.u32 %s5, 4
      %s253 = int_to_ptr.hbm [resolvable:$true] %s252
      %258 = dma.vmem_to_hbm [thread:$0]  %s251, 256, %s253, [#allocation4], 128, 128, 8
    $region37: #{tpu_custom_call.1} parent=1 // pred_fallthru
      _
    // Predicated region
    $region38: #{tpu_custom_call.1} parent=1 // pred_check
      _
    $region39: #{tpu_custom_call.1} parent=1 // pred_check_branch
      %260 = sbr.rel (0) target = $region41
    $region40: #{tpu_custom_call.1} parent=1 // pred_region
      %262 = dma.done [#allocation4], 256
    $region41: #{tpu_custom_call.1} parent=1 // pred_fallthru
      _
    %263 = vsyncpa [#allocation3], 1
    %264 = vsyncpa [#allocation6], 1
    %265 = vsyncpa [#allocation4], 1

</llo_original>
